<compile_context>
chip_gen: v6e
topology: v6e:2x2x1
jax: 0.10.0
libtpu: 0.0.40
codegen_flags: <defaults>
</compile_context>

<pallas_src>
import functools

import jax
import jax.numpy as jnp
from jax.experimental import pallas as pl
from jax.experimental.pallas import tpu as pltpu


def _round_up(v: int, m: int) -> int:
    return ((v + m - 1) // m) * m


def _odefunc_kernel(x_ref, w_ref, b_ref, o_ref, acc_ref, *, eps: float):
    """One (batch-tile, layer) grid step.

    x_ref:  (TN, Dp)       input rows (only consumed at l == 0)
    w_ref:  (1, Dp, Dp)    this layer's PRE-TRANSPOSED weight (W^T), native dtype
    b_ref:  (1, 1, Dp)     this layer's bias, native dtype
    o_ref:  (TN, Dp)       output rows (written only at l == depth-1)
    acc_ref:(TN, Dp) f32   activation accumulator, resident across the depth axis
    """
    l = pl.program_id(1)
    last = pl.num_programs(1) - 1

    # Layer 0: load the input into the f32 accumulator.
    @pl.when(l == 0)
    def _():
        acc_ref[...] = x_ref[...].astype(jnp.float32)

    # Layers > 0: the Sequential inserts LeakyReLU(0.2) before every ResLinear
    # except the first; its output is also the residual operand.
    @pl.when(l > 0)
    def _():
        a = acc_ref[...]
        acc_ref[...] = jnp.where(a > 0, a, 0.2 * a)

    h = acc_ref[...]                                    # f32 (TN, Dp)
    w = w_ref[0]                                        # (Dp, Dp) = W^T, native dtype
    # MXU matmul in the weight's native dtype, f32 accumulation; residual kept f32.
    hw = jnp.dot(h.astype(w.dtype), w, preferred_element_type=jnp.float32)
    acc_ref[...] = hw + b_ref[0].astype(jnp.float32) + h

    # Last layer: L2-normalize along the feature dim and store.
    @pl.when(l == last)
    def _():
        out = acc_ref[...]
        norm = jnp.sqrt(jnp.sum(out * out, axis=1, keepdims=True))  # (TN, 1)
        o_ref[...] = (out * pl.reciprocal(norm + eps, approx=True)).astype(o_ref.dtype)


def odefunc_forward(t, x, weights, biases, *, eps: float = 1e-6, block_n: int = 256):
    """Pallas implementation of ODEfunc.forward (depth >= 1 branch).

    Args:
      t:       unused (kept for ODE-solver signature parity).
      x:       (N, D) input.
      weights: (depth, D, D) stacked ResLinear weights (torch layout: (out, in)).
      biases:  (depth, 1, D) stacked ResLinear biases.
    Returns:
      (N, D) normalized output, same dtype as x.
    """
    del t  # not used by the PyTorch forward either
    depth, d, _ = weights.shape
    n = x.shape[0]
    out_dtype = x.dtype

    # Pre-transpose the weight stack once (kernel computes h @ W^T without .T).
    w_t = jnp.swapaxes(weights, 1, 2)                   # (depth, D, D) = W^T per layer

    # Lane-dense feature padding and sublane-aligned batch tiling.
    dp = max(128, _round_up(d, 128))
    tn = min(int(block_n), _round_up(max(n, 1), 8))
    n_pad = _round_up(max(n, 1), tn)

    x_p = x
    w_p = w_t
    b_p = biases
    if (n_pad, dp) != (n, d):
        x_p = jnp.zeros((n_pad, dp), x.dtype).at[:n, :d].set(x)
        w_p = jnp.zeros((depth, dp, dp), w_t.dtype).at[:, :d, :d].set(w_t)
        b_p = jnp.zeros((depth, 1, dp), biases.dtype).at[:, :, :d].set(biases)

    # VMEM budget: double-buffered streamed weights/bias + x/out tiles + f32 acc.
    vmem_bytes = (2 * dp * dp * w_p.dtype.itemsize
                  + 2 * dp * b_p.dtype.itemsize
                  + 2 * tn * dp * x_p.dtype.itemsize
                  + 2 * tn * dp * jnp.dtype(out_dtype).itemsize
                  + tn * dp * 4)
    vmem_limit = int(min(max(2 * vmem_bytes, 16 * 2**20), 64 * 2**20))

    kernel = functools.partial(_odefunc_kernel, eps=float(eps))
    out_p = pl.pallas_call(
        kernel,
        out_shape=jax.ShapeDtypeStruct((n_pad, dp), out_dtype),
        grid_spec=pltpu.PrefetchScalarGridSpec(
            num_scalar_prefetch=0,
            grid=(n_pad // tn, int(depth)),
            in_specs=[
                pl.BlockSpec((tn, dp), lambda i, l: (i, 0)),        # x (resident per i)
                pl.BlockSpec((1, dp, dp), lambda i, l: (l, 0, 0)),  # streamed W^T
                pl.BlockSpec((1, 1, dp), lambda i, l: (l, 0, 0)),   # streamed bias
            ],
            out_specs=pl.BlockSpec((tn, dp), lambda i, l: (i, 0)),
            scratch_shapes=[pltpu.VMEM((tn, dp), jnp.float32)],
        ),
        compiler_params=pltpu.CompilerParams(
            dimension_semantics=("parallel", "arbitrary"),
            vmem_limit_bytes=vmem_limit,
        ),
    )(x_p, w_p, b_p)

    return out_p[:n, :d]


def odefunc_reference(x, weights, biases, eps=1e-6):
    out = x.astype(jnp.float32)
    depth = weights.shape[0]
    for l in range(depth):
        if l > 0:
            out = jnp.where(out > 0, out, 0.2 * out)
        out = out @ weights[l].T.astype(jnp.float32) + biases[l].astype(jnp.float32) + out
    norm = jnp.sqrt(jnp.sum(out * out, axis=1, keepdims=True))
    return (out / (norm + eps)).astype(x.dtype)


if __name__ == "__main__":
    # Small deterministic problem: batch=8, dim=32, depth=2 (ResLinear, LeakyReLU, ResLinear).
    key = jax.random.PRNGKey(0)
    k_x, k_w, k_b = jax.random.split(key, 3)

    N, D, DEPTH = 8, 32, 2
    x = jax.random.normal(k_x, (N, D), dtype=jnp.float32)
    # torch nn.Linear-like init scale (deterministic, synthetic).
    bound = 1.0 / (D ** 0.5)
    weights = jax.random.uniform(k_w, (DEPTH, D, D), minval=-bound, maxval=bound,
                                 dtype=jnp.float32)
    biases = jax.random.uniform(k_b, (DEPTH, 1, D), minval=-bound, maxval=bound,
                                dtype=jnp.float32)
    t = jnp.float32(0.0)

    out = odefunc_forward(t, x, weights, biases)
    out = jax.block_until_ready(out)

    ref = odefunc_reference(x, weights, biases)
    assert out.shape == (N, D)
    # Tolerance loosened slightly for the approx-EUP reciprocal in the epilogue.
    assert jnp.allclose(out, ref, atol=2e-3, rtol=2e-3), "mismatch vs pure-JAX reference"

    # TODO(synk): depth == -1 (Constant module) branch not implemented; default path only.
    print("KERNEL_OK")
</pallas_src>

<mosaic_0001>
module attributes {stable_mosaic.version = 11 : i64} {
  func.func @_odefunc_kernel(%arg0: i32, %arg1: i32, %arg2: memref<8x128xf32, #tpu.memory_space<vmem>>, %arg3: memref<1x128x128xf32, #tpu.memory_space<vmem>>, %arg4: memref<1x1x128xf32, #tpu.memory_space<vmem>>, %arg5: memref<8x128xf32, #tpu.memory_space<vmem>>, %arg6: memref<8x128xf32, #tpu.memory_space<vmem>>) attributes {dimension_semantics = [#tpu.dimension_semantics<parallel>, #tpu.dimension_semantics<arbitrary>], iteration_bounds = array<i64: 1, 2>, scalar_prefetch = 0 : i64, scratch_operands = 1 : i64, tpu.core_type = #tpu.core_type<tc>, window_params = [{transform_indices = @transform_0, window_bounds = array<i64: 8, 128>}, {transform_indices = @transform_1, window_bounds = array<i64: 1, 128, 128>}, {transform_indices = @transform_2, window_bounds = array<i64: 1, 1, 128>}, {transform_indices = @transform_3, window_bounds = array<i64: 8, 128>}]} {
    %c0_i32 = arith.constant 0 : i32
    %0 = arith.cmpi eq, %arg1, %c0_i32 : i32
    %1 = arith.extui %0 : i1 to i32
    %c0_i32_0 = arith.constant 0 : i32
    %2 = arith.cmpi ne, %1, %c0_i32_0 : i32
    scf.if %2 {
      %c0_13 = arith.constant 0 : index
      %c0_14 = arith.constant 0 : index
      %19 = vector.load %arg2[%c0_13, %c0_14] : memref<8x128xf32, #tpu.memory_space<vmem>>, vector<8x128xf32>
      %c0_15 = arith.constant 0 : index
      %c0_16 = arith.constant 0 : index
      %20 = vector.load %arg6[%c0_15, %c0_16] : memref<8x128xf32, #tpu.memory_space<vmem>>, vector<8x128xf32>
      tpu.vector_store %arg6[%c0_15, %c0_16], %19 {strides = array<i32>} : memref<8x128xf32, #tpu.memory_space<vmem>>, vector<8x128xf32>,
    } else {
    }
    %c0_i32_1 = arith.constant 0 : i32
    %3 = arith.cmpi sgt, %arg1, %c0_i32_1 : i32
    %4 = arith.extui %3 : i1 to i32
    %c0_i32_2 = arith.constant 0 : i32
    %5 = arith.cmpi ne, %4, %c0_i32_2 : i32
    scf.if %5 {
      %c0_13 = arith.constant 0 : index
      %c0_14 = arith.constant 0 : index
      %19 = vector.load %arg6[%c0_13, %c0_14] : memref<8x128xf32, #tpu.memory_space<vmem>>, vector<8x128xf32>
      %cst_15 = arith.constant 0.000000e+00 : f32
      %20 = vector.broadcast %cst_15 : f32 to vector<8x128xf32>
      %21 = arith.cmpf ogt, %19, %20 : vector<8x128xf32>
      %cst_16 = arith.constant 2.000000e-01 : f32
      %22 = vector.broadcast %cst_16 : f32 to vector<8x128xf32>
      %23 = arith.mulf %22, %19 : vector<8x128xf32>
      %24 = arith.select %21, %19, %23 : vector<8x128xi1>, vector<8x128xf32>
      %c0_17 = arith.constant 0 : index
      %c0_18 = arith.constant 0 : index
      %25 = vector.load %arg6[%c0_17, %c0_18] : memref<8x128xf32, #tpu.memory_space<vmem>>, vector<8x128xf32>
      tpu.vector_store %arg6[%c0_17, %c0_18], %24 {strides = array<i32>} : memref<8x128xf32, #tpu.memory_space<vmem>>, vector<8x128xf32>,
    } else {
    }
    %c0 = arith.constant 0 : index
    %c0_3 = arith.constant 0 : index
    %6 = vector.load %arg6[%c0, %c0_3] : memref<8x128xf32, #tpu.memory_space<vmem>>, vector<8x128xf32>
    %c0_4 = arith.constant 0 : index
    %c0_5 = arith.constant 0 : index
    %c0_6 = arith.constant 0 : index
    %7 = vector.load %arg3[%c0_4, %c0_5, %c0_6] : memref<1x128x128xf32, #tpu.memory_space<vmem>>, vector<1x128x128xf32>
    %8 = vector.shape_cast %7 : vector<1x128x128xf32> to vector<128x128xf32>
    %cst = arith.constant dense<0.000000e+00> : vector<8x128xf32>
    %9 = tpu.matmul %6, %8, %cst {dimension_numbers = #tpu.dot_dimension_numbers<[1], [0], [0], [1], [0, 0, 1, 1], [], []>} : vector<8x128xf32>, vector<128x128xf32>, vector<8x128xf32> -> vector<8x128xf32>
    %c0_7 = arith.constant 0 : index
    %c0_8 = arith.constant 0 : index
    %c0_9 = arith.constant 0 : index
    %10 = vector.load %arg4[%c0_7, %c0_8, %c0_9] : memref<1x1x128xf32, #tpu.memory_space<vmem>>, vector<1x1x128xf32>
    %11 = vector.shape_cast %10 : vector<1x1x128xf32> to vector<1x128xf32>
    %12 = vector.broadcast %11 : vector<1x128xf32> to vector<8x128xf32>
    %13 = arith.addf %9, %12 : vector<8x128xf32>
    %14 = arith.addf %13, %6 : vector<8x128xf32>
    %c0_10 = arith.constant 0 : index
    %c0_11 = arith.constant 0 : index
    %15 = vector.load %arg6[%c0_10, %c0_11] : memref<8x128xf32, #tpu.memory_space<vmem>>, vector<8x128xf32>
    tpu.vector_store %arg6[%c0_10, %c0_11], %14 {strides = array<i32>} : memref<8x128xf32, #tpu.memory_space<vmem>>, vector<8x128xf32>,
    %c1_i32 = arith.constant 1 : i32
    %16 = arith.cmpi eq, %arg1, %c1_i32 : i32
    %17 = arith.extui %16 : i1 to i32
    %c0_i32_12 = arith.constant 0 : i32
    %18 = arith.cmpi ne, %17, %c0_i32_12 : i32
    scf.if %18 {
      %c0_13 = arith.constant 0 : index
      %c0_14 = arith.constant 0 : index
      %19 = vector.load %arg6[%c0_13, %c0_14] : memref<8x128xf32, #tpu.memory_space<vmem>>, vector<8x128xf32>
      %20 = arith.mulf %19, %19 : vector<8x128xf32>
      %cst_15 = arith.constant dense<0.000000e+00> : vector<8xf32>
      %21 = vector.multi_reduction <add>, %20, %cst_15 [1] : vector<8x128xf32> to vector<8xf32>
      %22 = vector.shape_cast %21 : vector<8xf32> to vector<8x1xf32>
      %23 = math.sqrt %22 : vector<8x1xf32>
      %cst_16 = arith.constant 9.99999997E-7 : f32
      %24 = vector.broadcast %cst_16 : f32 to vector<8x1xf32>
      %25 = arith.addf %23, %24 : vector<8x1xf32>
      %26 = tpu.reciprocal %25 {approx = true} : vector<8x1xf32> -> vector<8x1xf32>
      %27 = vector.broadcast %26 : vector<8x1xf32> to vector<8x128xf32>
      %28 = arith.mulf %19, %27 : vector<8x128xf32>
      %c0_17 = arith.constant 0 : index
      %c0_18 = arith.constant 0 : index
      %29 = vector.load %arg5[%c0_17, %c0_18] : memref<8x128xf32, #tpu.memory_space<vmem>>, vector<8x128xf32>
      tpu.vector_store %arg5[%c0_17, %c0_18], %28 {strides = array<i32>} : memref<8x128xf32, #tpu.memory_space<vmem>>, vector<8x128xf32>,
    } else {
    }
    return
  }
  func.func @transform_0(%arg0: i32, %arg1: i32) -> (i32, i32) {
    %c0_i32 = arith.constant 0 : i32
    %c0_i32_0 = arith.constant 0 : i32
    return %arg0, %c0_i32 : i32, i32
  }
  func.func @transform_1(%arg0: i32, %arg1: i32) -> (i32, i32, i32) {
    %c0_i32 = arith.constant 0 : i32
    %c0_i32_0 = arith.constant 0 : i32
    %c0_i32_1 = arith.constant 0 : i32
    return %arg1, %c0_i32, %c0_i32_0 : i32, i32, i32
  }
  func.func @transform_2(%arg0: i32, %arg1: i32) -> (i32, i32, i32) {
    %c0_i32 = arith.constant 0 : i32
    %c0_i32_0 = arith.constant 0 : i32
    %c0_i32_1 = arith.constant 0 : i32
    return %arg1, %c0_i32, %c0_i32_0 : i32, i32, i32
  }
  func.func @transform_3(%arg0: i32, %arg1: i32) -> (i32, i32) {
    %c0_i32 = arith.constant 0 : i32
    %c0_i32_0 = arith.constant 0 : i32
    return %arg0, %c0_i32 : i32, i32
  }
}

</mosaic_0001>

<llo_original>
// kernel: tpu_custom_call.1
$region0: #{tpu_custom_call.1}
  #allocation0 [shape = 'u32[]', space=smem, size = 0x4, offset = 0x4, fixed_abs, tag = 'smem constant byte address 0x4 - core index']
  #allocation1 [shape = 'u32[144,128]{1,0:T(1,128)}', space=vmem, size = 0x12000, scoped, tag = 'internal scratch']
  #allocation2 [shape = 'f32[8,128]{1,0:T(8,128)}', space=vmem, size = 0x1000, scoped, tag = 'scratch operand']
  %s0 = inlined_call_operand.hbm [shape: f32[8,128], index: 0, kind: input, shape index: {}]
  %s1 = inlined_call_operand.hbm [shape: f32[2,128,128], index: 1, kind: input, shape index: {}]
  %s2 = inlined_call_operand.vmem [shape: f32[2,1,128], index: 2, kind: input, shape index: {}]
  %s3 = inlined_call_operand.hbm [shape: f32[8,128], index: 3, kind: output, shape index: {}]
  %s4 = sld [smem:[#allocation0]]
  $region65: #{tpu_custom_call.1} parent=0
    _
  %s6 = ssub.s32 1, %s4
  %s7 = scalar_select 0, %s6, %s4
  $region1: #{tpu_custom_call.1} parent=0
    #allocation3 [shape = 'u8[4096]{0}', space=vmem, size = 0x1000, scoped, tag = 'input window, operand 0, single buffered']
    #allocation4 [shape = 's32[2]{0}', space=sflag, size = 0x8, scoped, tag = 'scoped memory for tpu_custom_call.1']
    #allocation5 [shape = 's32[2]{0}', space=sflag, size = 0x8, scoped, tag = 'scoped memory for tpu_custom_call.1']
    #allocation6 [shape = 'u8[131072]{0}', space=vmem, size = 0x20000, scoped, tag = 'input window, operand 1']
    #allocation7 [shape = 's32[2]{0}', space=sflag, size = 0x8, scoped, tag = 'scoped memory for tpu_custom_call.1']
    #allocation8 [shape = 'u8[4096]{0}', space=vmem, size = 0x1000, scoped, tag = 'output window, operand 0, single buffered']
    %8 = vsyncpa [#allocation4], 0
    %9 = vsyncpa [#allocation7], 0
    %s10 = scalar_lea.sflag [#allocation7], 1
    %11 = vsyncpa %s10, 0
    %12 = vsyncpa [#allocation5], 0
    loop: start=0, step=1, limit=4
    $region2: #{tpu_custom_call.1} parent=1 // loop_pre_header
      _
    $region3: #{tpu_custom_call.1} parent=1 // loop_header
      %s14 = sphi 0, %s18
      %p15 = scmp.ge.s32.totalorder %s14, 4
      %s21 = sphi 0, %s33
      %s22 = sphi 0, %s29
      %s23 = sphi 0, %s21
      %s24 = sphi 0, %s22
      %s25 = sphi 0, %s23
      %s26 = sphi 0, %s24
      %s36 = sphi 0, %s38
      %s39 = sphi 0, %s36
      %s40 = sphi 0, %s39
      %s56 = sphi 0, %s40
      %s62 = sphi 0, %s64
      %s65 = sphi 0, %s62
      %s66 = sphi 0, %s65
      %s82 = sphi 0, %s66
      %s88 = sphi 0, %s90
      %s91 = sphi 0, %s88
      %s92 = sphi 0, %s91
      %s108 = sphi 0, %s92
      %s114 = sphi 0, %s116
      %s117 = sphi 0, %s114
      %s118 = sphi 0, %s117
      %s134 = sphi 0, %s118
    $region4: #{tpu_custom_call.1} parent=1 // loop_header_branch
      %17 = sbr.rel (%p15) target = $region8
    $region5: #{tpu_custom_call.1} parent=1 // loop_body
      %s19 = ssub.s32 %s14, 1
      %s20 = ssub.s32 %s14, 2
      %s27 = sadd.s32 1, %s22
      %p28 = scmp.ge.s32.totalorder %s27, 2
      %s29 = scalar_select %p28, 0, %s27
      %s30 = sadd.s32 1, %s21
      %s31 = scalar_select %p28, %s30, %s21
      %p32 = scmp.ge.s32.totalorder %s31, 1
      %s33 = scalar_select %p32, 0, %s31
      %s34 = ssub.s32 %s21, %s33
      %p35 = scmp.eq.s32.totalorder %s34, 0
      %s37 = sadd.s32 %s36, 1
      %s38 = scalar_select %p35, %s36, %s37
      %p41 = pneg %p35
      %p42 = scmp.eq.s32.totalorder %s14, 1
      %p43 = por %p41, %p42
      %p44 = scmp.ne.s32.totalorder %s36, %s39
      %p45 = scmp.eq.s32.totalorder %s14, 0
      %p46 = por %p44, %p45
      %p47 = scmp.ne.s32.totalorder %s36, %s39
      %p48 = scmp.eq.s32.totalorder %s19, 1
      %p49 = por %p47, %p48
      %p50 = scmp.ne.s32.totalorder %s39, %s40
      %p51 = scmp.eq.s32.totalorder %s19, 0
      %p52 = por %p50, %p51
      %p53 = scmp.ne.s32.totalorder %s39, %s40
      %p54 = scmp.eq.s32.totalorder %s20, 1
      %p55 = por %p53, %p54
      %p57 = scmp.ne.s32.totalorder %s40, %s56
      %p58 = scmp.eq.s32.totalorder %s20, 0
      %p59 = por %p57, %p58
      %s60 = ssub.s32 %s22, %s29
      %p61 = scmp.eq.s32.totalorder %s60, 0
      %s63 = sadd.s32 %s62, 1
      %s64 = scalar_select %p61, %s62, %s63
      %p67 = pneg %p61
      %p68 = scmp.eq.s32.totalorder %s14, 1
      %p69 = por %p67, %p68
      %p70 = scmp.ne.s32.totalorder %s62, %s65
      %p71 = scmp.eq.s32.totalorder %s14, 0
      %p72 = por %p70, %p71
      %p73 = scmp.ne.s32.totalorder %s62, %s65
      %p74 = scmp.eq.s32.totalorder %s19, 1
      %p75 = por %p73, %p74
      %p76 = scmp.ne.s32.totalorder %s65, %s66
      %p77 = scmp.eq.s32.totalorder %s19, 0
      %p78 = por %p76, %p77
      %p79 = scmp.ne.s32.totalorder %s65, %s66
      %p80 = scmp.eq.s32.totalorder %s20, 1
      %p81 = por %p79, %p80
      %p83 = scmp.ne.s32.totalorder %s66, %s82
      %p84 = scmp.eq.s32.totalorder %s20, 0
      %p85 = por %p83, %p84
      %s86 = ssub.s32 %s22, %s29
      %p87 = scmp.eq.s32.totalorder %s86, 0
      %s89 = sadd.s32 %s88, 1
      %s90 = scalar_select %p87, %s88, %s89
      %p93 = pneg %p87
      %p94 = scmp.eq.s32.totalorder %s14, 1
      %p95 = por %p93, %p94
      %p96 = scmp.ne.s32.totalorder %s88, %s91
      %p97 = scmp.eq.s32.totalorder %s14, 0
      %p98 = por %p96, %p97
      %p99 = scmp.ne.s32.totalorder %s88, %s91
      %p100 = scmp.eq.s32.totalorder %s19, 1
      %p101 = por %p99, %p100
      %p102 = scmp.ne.s32.totalorder %s91, %s92
      %p103 = scmp.eq.s32.totalorder %s19, 0
      %p104 = por %p102, %p103
      %p105 = scmp.ne.s32.totalorder %s91, %s92
      %p106 = scmp.eq.s32.totalorder %s20, 1
      %p107 = por %p105, %p106
      %p109 = scmp.ne.s32.totalorder %s92, %s108
      %p110 = scmp.eq.s32.totalorder %s20, 0
      %p111 = por %p109, %p110
      %s112 = ssub.s32 %s21, %s33
      %p113 = scmp.eq.s32.totalorder %s112, 0
      %s115 = sadd.s32 %s114, 1
      %s116 = scalar_select %p113, %s114, %s115
      %p119 = pneg %p113
      %p120 = scmp.eq.s32.totalorder %s14, 1
      %p121 = por %p119, %p120
      %p122 = scmp.ne.s32.totalorder %s114, %s117
      %p123 = scmp.eq.s32.totalorder %s14, 0
      %p124 = por %p122, %p123
      %p125 = scmp.ne.s32.totalorder %s114, %s117
      %p126 = scmp.eq.s32.totalorder %s19, 1
      %p127 = por %p125, %p126
      %p128 = scmp.ne.s32.totalorder %s117, %s118
      %p129 = scmp.eq.s32.totalorder %s19, 0
      %p130 = por %p128, %p129
      %p131 = scmp.ne.s32.totalorder %s117, %s118
      %p132 = scmp.eq.s32.totalorder %s20, 1
      %p133 = por %p131, %p132
      %p135 = scmp.ne.s32.totalorder %s118, %s134
      %p136 = scmp.eq.s32.totalorder %s20, 0
      %p137 = por %p135, %p136
      %p138 = scmp.le.s32.totalorder 1, %s14
      %p139 = scmp.lt.s32.totalorder %s14, 3
      %p140 = pnand %p138, %p139
      %p141 = pneg %p140
      // Predicated region
      $region9: #{tpu_custom_call.1} parent=5 // pred_check
        _
      $region10: #{tpu_custom_call.1} parent=5 // pred_check_branch
        %143 = sbr.rel (%p140) target = $region12
      $region11: #{tpu_custom_call.1} parent=5 // pred_region
        %s144 = ssub.s32 %s14, 1
        // Predicated region
        $region13: #{tpu_custom_call.1} parent=11 // pred_check
          %p145 = pneg %p52
        $region14: #{tpu_custom_call.1} parent=11 // pred_check_branch
          %147 = sbr.rel (%p145) target = $region16
        $region15: #{tpu_custom_call.1} parent=11 // pred_region
          %s149 = ssub.s32 128, 128
          %150 = vsyncadd [#allocation4], %s149
          %s151 = smul.addr %s23, 128
          %s152 = scalar_lea.hbm %s0, %s151
          %s154 = sshll.u32 [#allocation3], 4
          %s155 = int_to_ptr.vmem [resolvable:$true] %s154
          %157 = dma.hbm_to_vmem [thread:$0]  %s152, 128, %s155, [#allocation4]
        $region16: #{tpu_custom_call.1} parent=11 // pred_fallthru
          _
      $region12: #{tpu_custom_call.1} parent=5 // pred_fallthru
        _
      %p158 = scmp.lt.s32.totalorder %s14, 2
      // Predicated region
      $region17: #{tpu_custom_call.1} parent=5 // pred_check
        %p159 = pneg %p158
      $region18: #{tpu_custom_call.1} parent=5 // pred_check_branch
        %161 = sbr.rel (%p159) target = $region20
      $region19: #{tpu_custom_call.1} parent=5 // pred_region
        // Predicated region
        $region21: #{tpu_custom_call.1} parent=19 // pred_check
          %p162 = pneg %p72
        $region22: #{tpu_custom_call.1} parent=19 // pred_check_branch
          %164 = sbr.rel (%p162) target = $region24
        $region23: #{tpu_custom_call.1} parent=19 // pred_region
          %s165 = sand.u32 %s62, 1
          %s166 = scalar_lea.sflag [#allocation7], %s165
          %s167 = sand.u32 %s62, 1
          %s168 = smul.addr %s167, 128
          %s169 = scalar_lea.vmem [#allocation6], %s168
          %s171 = ssub.s32 2048, 2048
          %172 = vsyncadd %s166, %s171
          %s173 = smul.addr %s22, 16
          %s174 = smul.addr %s173, 128
          %s175 = scalar_lea.hbm %s1, %s174
          %s176 = sshll.u32 %s169, 4
          %s177 = int_to_ptr.vmem [resolvable:$true] %s176
          %182 = dma.hbm_to_vmem [thread:$0]  %s175, 2048, %s177, %s166, 128, 128, 8
        $region24: #{tpu_custom_call.1} parent=19 // pred_fallthru
          _
        // Predicated region
        $region25: #{tpu_custom_call.1} parent=19 // pred_check
          %p183 = pneg %p98
        $region26: #{tpu_custom_call.1} parent=19 // pred_check_branch
          %185 = sbr.rel (%p183) target = $region28
        $region27: #{tpu_custom_call.1} parent=19 // pred_region
          %p186 = scmp.lt.s32.totalorder %s22, 1
          %s187 = scalar_select %p186, %s22, 1
          %s188 = scalar_lea.vmem %s2, %s187
        $region28: #{tpu_custom_call.1} parent=19 // pred_fallthru
          _
      $region20: #{tpu_custom_call.1} parent=5 // pred_fallthru
        _
      %p189 = scmp.le.s32.totalorder 1, %s14
      %p190 = scmp.lt.s32.totalorder %s14, 3
      %p191 = pnand %p189, %p190
      %p192 = pneg %p191
      // Predicated region
      $region29: #{tpu_custom_call.1} parent=5 // pred_check
        _
      $region30: #{tpu_custom_call.1} parent=5 // pred_check_branch
        %194 = sbr.rel (%p191) target = $region32
      $region31: #{tpu_custom_call.1} parent=5 // pred_region
        %s195 = ssub.s32 %s14, 1
        // Predicated region
        $region33: #{tpu_custom_call.1} parent=31 // pred_check
          %p196 = pneg %p52
        $region34: #{tpu_custom_call.1} parent=31 // pred_check_branch
          %198 = sbr.rel (%p196) target = $region36
        $region35: #{tpu_custom_call.1} parent=31 // pred_region
          %199 = dma.done [#allocation4], 128
        $region36: #{tpu_custom_call.1} parent=31 // pred_fallthru
          _
        %s200 = sand.u32 %s65, 1
        %s201 = scalar_lea.sflag [#allocation7], %s200
        %s202 = sand.u32 %s65, 1
        %s203 = smul.addr %s202, 128
        %s204 = scalar_lea.vmem [#allocation6], %s203
        // Predicated region
        $region37: #{tpu_custom_call.1} parent=31 // pred_check
          %p205 = pneg %p78
        $region38: #{tpu_custom_call.1} parent=31 // pred_check_branch
          %207 = sbr.rel (%p205) target = $region40
        $region39: #{tpu_custom_call.1} parent=31 // pred_region
          %208 = dma.done %s201, 2048
        $region40: #{tpu_custom_call.1} parent=31 // pred_fallthru
          _
        %p209 = pneg %p52
        %p210 = pneg %p49
        %s211 = sand.u32 %s65, 1
        %s212 = scalar_lea.sflag [#allocation7], %s211
        %s213 = sand.u32 %s65, 1
        %s214 = smul.addr %s213, 128
        %s215 = scalar_lea.vmem [#allocation6], %s214
        %p216 = pneg %p78
        %p217 = pneg %p75
        %p218 = scmp.lt.s32.totalorder %s24, 1
        %s219 = scalar_select %p218, %s24, 1
        %s220 = scalar_lea.vmem %s2, %s219
        %p221 = pneg %p104
        %p222 = pneg %p101
        %p223 = pneg %p130
        %p224 = pneg %p127
        %p225 = scmp.lt.s32.totalorder %s24, 1
        %s226 = scalar_select %p225, %s24, 1
        %s227 = scalar_lea.vmem %s2, %s226
        %p228 = scmp.eq.s32.totalorder %s24, 0
        // Predicated region
        $region41: #{tpu_custom_call.1} parent=31 // pred_check
          %p229 = pneg %p228
        $region42: #{tpu_custom_call.1} parent=31 // pred_check_branch
          %231 = sbr.rel (%p229) target = $region44
        $region43: #{tpu_custom_call.1} parent=31 // pred_region
          %v232 = vld [vmem:[#allocation3] sm:$0xff]
          %233 = vst [vmem:[#allocation2] sm:$0xff] %v232
        $region44: #{tpu_custom_call.1} parent=31 // pred_fallthru
          _
        %p234 = scmp.gt.s32.totalorder %s24, 0
        // Predicated region
        $region45: #{tpu_custom_call.1} parent=31 // pred_check
          %p235 = pneg %p234
        $region46: #{tpu_custom_call.1} parent=31 // pred_check_branch
          %237 = sbr.rel (%p235) target = $region48
        $region47: #{tpu_custom_call.1} parent=31 // pred_region
          %v238 = vld [vmem:[#allocation2] sm:$0xff]
          %vm239 = vcmp.gt.f32.partialorder %v238, 0.0
          %v240 = vmul.f32 %v238, 0.2
          %v241 = vsel %vm239, %v238, %v240
          %242 = vst [vmem:[#allocation2] sm:$0xff] %v241
        $region48: #{tpu_custom_call.1} parent=31 // pred_fallthru
          _
        %v243 = vld [vmem:[#allocation2] sm:$0xff]
        %v244 = vld [vmem:[%s204] sm:$0xff]
        %v245 = vld [vmem:[%s204 + $0x8] sm:$0xff]
        %v246 = vld [vmem:[%s204 + $0x10] sm:$0xff]
        %v247 = vld [vmem:[%s204 + $0x18] sm:$0xff]
        %v248 = vld [vmem:[%s204 + $0x20] sm:$0xff]
        %v249 = vld [vmem:[%s204 + $0x28] sm:$0xff]
        %v250 = vld [vmem:[%s204 + $0x30] sm:$0xff]
        %v251 = vld [vmem:[%s204 + $0x38] sm:$0xff]
        %v252 = vld [vmem:[%s204 + $0x40] sm:$0xff]
        %v253 = vld [vmem:[%s204 + $0x48] sm:$0xff]
        %v254 = vld [vmem:[%s204 + $0x50] sm:$0xff]
        %v255 = vld [vmem:[%s204 + $0x58] sm:$0xff]
        %v256 = vld [vmem:[%s204 + $0x60] sm:$0xff]
        %v257 = vld [vmem:[%s204 + $0x68] sm:$0xff]
        %v258 = vld [vmem:[%s204 + $0x70] sm:$0xff]
        %v259 = vld [vmem:[%s204 + $0x78] sm:$0xff]
        %v260 = vld [vmem:[%s227] sm:$0x1]
        %v262 = vlaneseq
        %v263 = vshrl.u32 %v262, 7
        %v264 = vsub.s32 0, %v263
        %v265 = vrot.slane %v260, %v264
        %267 = vmatprep.subr.mxu0 0.0
        %268 = vmatpush1.msra.mxu0 %v259
        %269 = vmatprep.subr.mxu0 0.0
        %270 = vmatpush1.msra.mxu0 %v258
        %271 = vmatprep.subr.mxu0 0.0
        %272 = vmatpush1.msra.mxu0 %v257
        %273 = vmatprep.subr.mxu0 0.0
        %274 = vmatpush1.msra.mxu0 %v256
        %275 = vmatprep.subr.mxu0 0.0
        %276 = vmatpush1.msra.mxu0 %v255
        %277 = vmatprep.subr.mxu0 0.0
        %278 = vmatpush1.msra.mxu0 %v254
        %279 = vmatprep.subr.mxu0 0.0
        %280 = vmatpush1.msra.mxu0 %v253
        %281 = vmatprep.subr.mxu0 0.0
        %282 = vmatpush1.msra.mxu0 %v252
        %283 = vmatprep.subr.mxu0 0.0
        %284 = vmatpush1.msra.mxu0 %v251
        %285 = vmatprep.subr.mxu0 0.0
        %286 = vmatpush1.msra.mxu0 %v250
        %287 = vmatprep.subr.mxu0 0.0
        %288 = vmatpush1.msra.mxu0 %v249
        %289 = vmatprep.subr.mxu0 0.0
        %290 = vmatpush1.msra.mxu0 %v248
        %291 = vmatprep.subr.mxu0 0.0
        %292 = vmatpush1.msra.mxu0 %v247
        %293 = vmatprep.subr.mxu0 0.0
        %294 = vmatpush1.msra.mxu0 %v246
        %295 = vmatprep.subr.mxu0 0.0
        %296 = vmatpush1.msra.mxu0 %v245
        %297 = vmatprep.subr.mxu0 0.0
        %298 = vmatpush1.msra.mxu0 %v244
        %299 = vmatprep.subr.mxu0 0.0
        %300 = vmatpush2.msra.mxu0 0.0
        %301 = vmatprep.subr.mxu0 0.0
        %302 = vmatpush2.msra.mxu0 0.0
        %303 = vmatprep.subr.mxu0 0.0
        %304 = vmatpush2.msra.mxu0 0.0
        %305 = vmatprep.subr.mxu0 0.0
        %306 = vmatpush2.msra.mxu0 0.0
        %307 = vmatprep.subr.mxu0 0.0
        %308 = vmatpush2.msra.mxu0 0.0
        %309 = vmatprep.subr.mxu0 0.0
        %310 = vmatpush2.msra.mxu0 0.0
        %311 = vmatprep.subr.mxu0 0.0
        %312 = vmatpush2.msra.mxu0 0.0
        %313 = vmatprep.subr.mxu0 0.0
        %314 = vmatpush2.msra.mxu0 0.0
        %315 = vmatprep.subr.mxu0 0.0
        %316 = vmatpush2.msra.mxu0 0.0
        %317 = vmatprep.subr.mxu0 0.0
        %318 = vmatpush2.msra.mxu0 0.0
        %319 = vmatprep.subr.mxu0 0.0
        %320 = vmatpush2.msra.mxu0 0.0
        %321 = vmatprep.subr.mxu0 0.0
        %322 = vmatpush2.msra.mxu0 0.0
        %323 = vmatprep.subr.mxu0 0.0
        %324 = vmatpush2.msra.mxu0 0.0
        %325 = vmatprep.subr.mxu0 0.0
        %326 = vmatpush2.msra.mxu0 0.0
        %327 = vmatprep.subr.mxu0 0.0
        %328 = vmatpush2.msra.mxu0 0.0
        %329 = vmatprep.subr.mxu0 0.0
        %330 = vmatpush2.msra.mxu0 0.0
        %331 = vmatprep.mubr.f32.mxu0 0.0
        %332 = vmatmul.mubr.f32.gmra.mxu0 %v243
        %v333 = vpop.f32.mrf.mxu0
        %v334 = vadd.f32 %v265, %v333
        %v335 = vpop.f32.mrf.mxu0
        %336 = vdwg.mxu0
        %v337 = vadd.f32 %v334, %v243
        %338 = vst [vmem:[#allocation2] sm:$0xff] %v337
        %p339 = scmp.eq.s32.totalorder %s24, 1
        // Predicated region
        $region49: #{tpu_custom_call.1} parent=31 // pred_check
          %p340 = pneg %p339
        $region50: #{tpu_custom_call.1} parent=31 // pred_check_branch
          %342 = sbr.rel (%p340) target = $region52
        $region51: #{tpu_custom_call.1} parent=31 // pred_region
          %v343 = vld [vmem:[#allocation2] sm:$0xff]
          %v344 = vmul.f32 %v343, %v343
          %345 = vadd.xlane.f32.xlu0 %v344
          %v346 = vpop.xlane.xlu0 %345
          %v347 = vrsqrt.pop %v346
          %v348 = vmul.f32 %v346, %v347
          %vm349 = vcmp.eq.f32.partialorder %v346, inf
          %v350 = vsel %vm349, %v346, %v348
          %vm351 = vcmp.eq.f32.partialorder %v346, 0.0
          %v352 = vand.u32 %v346, 2147483648
          %v353 = vsel %vm351, %v352, %v350
          %v354 = vadd.f32 %v353, 1e-06
          %v355 = vrcp.pop %v354
          %v356 = vmul.f32 %v343, %v355
          %357 = vst [vmem:[#allocation8] sm:$0xff] %v356
        $region52: #{tpu_custom_call.1} parent=31 // pred_fallthru
          _
        // Predicated region
        $region53: #{tpu_custom_call.1} parent=31 // pred_check
          %p358 = pneg %p127
        $region54: #{tpu_custom_call.1} parent=31 // pred_check_branch
          %360 = sbr.rel (%p358) target = $region56
        $region55: #{tpu_custom_call.1} parent=31 // pred_region
          %s362 = ssub.s32 128, 128
          %363 = vsyncadd [#allocation5], %s362
          %s364 = smul.addr %s23, 128
          %s365 = scalar_lea.hbm %s3, %s364
          %s367 = sshll.u32 [#allocation8], 4
          %s368 = int_to_ptr.vmem [resolvable:$true] %s367
          %370 = dma.vmem_to_hbm [thread:$0]  %s368, 128, %s365, [#allocation5]
        $region56: #{tpu_custom_call.1} parent=31 // pred_fallthru
          _
        // Predicated region
        $region57: #{tpu_custom_call.1} parent=31 // pred_check
          %p371 = pneg %p127
        $region58: #{tpu_custom_call.1} parent=31 // pred_check_branch
          %373 = sbr.rel (%p371) target = $region60
        $region59: #{tpu_custom_call.1} parent=31 // pred_region
          %374 = dma.done [#allocation5], 128
        $region60: #{tpu_custom_call.1} parent=31 // pred_fallthru
          _
      $region32: #{tpu_custom_call.1} parent=5 // pred_fallthru
        _
      %p375 = scmp.le.s32.totalorder 2, %s14
      // Predicated region
      $region61: #{tpu_custom_call.1} parent=5 // pred_check
        %p376 = pneg %p375
      $region62: #{tpu_custom_call.1} parent=5 // pred_check_branch
        %378 = sbr.rel (%p376) target = $region64
      $region63: #{tpu_custom_call.1} parent=5 // pred_region
        %s379 = ssub.s32 %s14, 2
      $region64: #{tpu_custom_call.1} parent=5 // pred_fallthru
        _
    $region6: #{tpu_custom_call.1} parent=1 // loop_footer
      %s18 = sadd.s32 1, %s14
    $region7: #{tpu_custom_call.1} parent=1 // loop_footer_branch
      %13 = sbr.rel target = $region3
    $region8: #{tpu_custom_call.1} parent=1 // loop_exit
      _
    %380 = vsyncpa [#allocation4], 1
    %s381 = scalar_lea.sflag [#allocation4], 1
    %382 = vsyncpa %s381, 1
    %383 = vsyncpa [#allocation7], 1
    %s384 = scalar_lea.sflag [#allocation7], 1
    %385 = vsyncpa %s384, 1
    %386 = vsyncpa [#allocation5], 1
    %s387 = scalar_lea.sflag [#allocation5], 1
    %388 = vsyncpa %s387, 1

</llo_original>
